<compile_context>
chip_gen: v7x
topology: tpu7x:2x2x1
jax: 0.10.0
libtpu: 0.0.40
codegen_flags: <defaults>
</compile_context>

<pallas_src>
import functools

import jax
import jax.numpy as jnp
from jax.experimental import pallas as pl
from jax.experimental.pallas import tpu as pltpu


def decoder_rnn_kernel(x_ref, wih_ref, whh_ref, b_ref, wd_ref, bd_ref, out_ref,
                       *, seq_len, batch, trim_tap):
    """Single-invocation kernel (everything fits in VMEM at these shapes).

    x_ref  : [B*T, I] f32      batch-major input, row b*T + t = x[b, t]
    wih_ref: [I, H]   bf16     == W_ih^T (pre-cast at init)
    whh_ref: [H, H]   bf16     == W_hh^T (pre-cast at init)
    b_ref  : [1, H]   f32      == b_ih + b_hh
    wd_ref : [trim_len*H, Op] bf16   lane-padded W_dense^T (pre-padded at init)
    bd_ref : [1, Op]  f32      lane-padded dense bias
    out_ref: [B, Op]  f32      lane-padded output
    """
    T, B = seq_len, batch
    trim_len = 2 * trim_tap + 1
    start = T // 2 - trim_tap                                   # static

    wih = wih_ref[...]                                          # bf16
    whh = whh_ref[...]                                          # bf16

    # Hoisted input projection + shared bias: one MXU pass, entirely off the
    # serial recurrence chain.  bf16 operands, f32 accumulation.
    pre_all = (jnp.dot(x_ref[...].astype(jnp.bfloat16), wih,
                       preferred_element_type=jnp.float32)
               + b_ref[...])                                    # [B*T, H] f32

    def pre_at(t):
        # Rows {b*T + t}: B static unit-stride row slices + one sublane concat.
        # Independent of h, so the scheduler can hoist it off the critical path.
        rows = [pre_all[b * T + t:b * T + t + 1, :] for b in range(B)]
        return rows[0] if B == 1 else jnp.concatenate(rows, axis=0)   # [B, H]

    # Step 0: h_prev == 0, so h @ Whh is skipped entirely.
    h = jnp.tanh(pre_at(0))                                     # [B, H] f32
    h_trim = []
    if start <= 0 < start + trim_len:
        h_trim.append(h.astype(jnp.bfloat16))

    # Remaining steps: fully unrolled at trace time (T static & small) so the
    # LLO scheduler overlaps casts / pre_t extraction with the MXU+tanh chain.
    for t in range(1, T):
        h = jnp.tanh(jnp.dot(h.astype(jnp.bfloat16), whh,
                             preferred_element_type=jnp.float32)
                     + pre_at(t))
        if start <= t < start + trim_len:
            h_trim.append(h.astype(jnp.bfloat16))

    # Dense head: one MXU contraction over the lane-concatenated trim window
    # (trim_len*H <= 128 lanes) instead of trim_len accumulate pops.
    h_cat = jnp.concatenate(h_trim, axis=-1)                    # [B, trim_len*H]
    out_ref[...] = (jnp.dot(h_cat, wd_ref[...],
                            preferred_element_type=jnp.float32)
                    + bd_ref[...])


def decoder_forward(x_bti, params, trim_tap):
    """x_bti: [B, T, I] batch-first (PyTorch convention)."""
    x_bti = x_bti.astype(jnp.float32)
    B, T, I = x_bti.shape
    O = params["out_size"]
    o_pad = params["bd_pad"].shape[-1]
    trim_len = 2 * trim_tap + 1
    start = T // 2 - trim_tap
    if start < 0 or start + trim_len > T:
        raise ValueError("trim_tap too large for sequence length")

    # Free (bitcast) reshape -- no per-call transpose/copy kernel.
    x_flat = x_bti.reshape(B * T, I)

    kernel = functools.partial(decoder_rnn_kernel,
                               seq_len=T, batch=B, trim_tap=trim_tap)
    vmem = pl.BlockSpec(memory_space=pltpu.MemorySpace.VMEM)

    out_pad = pl.pallas_call(
        kernel,
        out_shape=jax.ShapeDtypeStruct((B, o_pad), jnp.float32),
        in_specs=[vmem] * 6,
        out_specs=vmem,
    )(x_flat, params["wih_bf"], params["whh_bf"], params["b"],
      params["wd_pad"], params["bd_pad"])

    return out_pad[:, :O]


def reference_forward(x_bti, params, trim_tap):
    """Pure-JAX f32 reference (mirrors the PyTorch forward)."""
    x_tbi = jnp.transpose(x_bti, (1, 0, 2))
    T, B, _ = x_tbi.shape
    H = params["whh_T"].shape[0]

    def step(h, x_t):
        h_new = jnp.tanh(x_t @ params["wih_T"] + h @ params["whh_T"] + params["b"])
        return h_new, h_new

    _, hs = jax.lax.scan(step, jnp.zeros((B, H), jnp.float32), x_tbi)  # [T, B, H]
    rnn_out = jnp.transpose(hs, (1, 0, 2))                             # [B, T, H]
    trim_len = 2 * trim_tap + 1
    start = T // 2 - trim_tap
    trim = rnn_out[:, start:start + trim_len, :]
    flat = trim.reshape(B, trim_len * H)
    return flat @ params["wd_T"] + params["bd"]


def init_params(key, input_size, n_hiddens, output_size, trim_tap):
    """All kernel-side preprocessing (padding, reshapes, bf16 casts) happens
    here, once, instead of per forward call."""
    trim_len = 2 * trim_tap + 1
    k = jax.random.split(key, 6)
    s = 1.0 / jnp.sqrt(n_hiddens)
    # PyTorch nn.RNN stores W_ih [H, I], W_hh [H, H]; we pass their transposes.
    w_ih = jax.random.uniform(k[0], (n_hiddens, input_size), jnp.float32, -s, s)
    w_hh = jax.random.uniform(k[1], (n_hiddens, n_hiddens), jnp.float32, -s, s)
    b_ih = jax.random.uniform(k[2], (n_hiddens,), jnp.float32, -s, s)
    b_hh = jax.random.uniform(k[3], (n_hiddens,), jnp.float32, -s, s)
    # nn.Linear(trim_len * H, output_size): weight [O, trim_len*H]
    d_in = trim_len * n_hiddens
    sd = 1.0 / jnp.sqrt(d_in)
    w_d = jax.random.uniform(k[4], (output_size, d_in), jnp.float32, -sd, sd)
    b_d = jax.random.uniform(k[5], (output_size,), jnp.float32, -sd, sd)

    # Lane-dense output: pad O up to a multiple of 128 (zero lanes are inert).
    o_pad = -(-output_size // 128) * 128
    wd_T = w_d.T                                               # [trim_len*H, O]
    bd = b_d.reshape(1, output_size)
    wd_pad = jnp.pad(wd_T, ((0, 0), (0, o_pad - output_size))).astype(jnp.bfloat16)
    bd_pad = jnp.pad(bd, ((0, 0), (0, o_pad - output_size)))   # f32

    return {
        # f32 copies for the reference implementation.
        "wih_T": w_ih.T,                           # [I, H]
        "whh_T": w_hh.T,                           # [H, H]
        "wd_T": wd_T,                              # [trim_len*H, O]
        "bd": bd,                                  # [1, O]
        # kernel-side (bf16 MXU operands, pre-padded dense head).
        "wih_bf": w_ih.T.astype(jnp.bfloat16),     # [I, H]
        "whh_bf": w_hh.T.astype(jnp.bfloat16),     # [H, H]
        "b": (b_ih + b_hh).reshape(1, n_hiddens),  # [1, H] f32
        "wd_pad": wd_pad,                          # [trim_len*H, o_pad] bf16
        "bd_pad": bd_pad,                          # [1, o_pad] f32
        "out_size": output_size,
    }


if __name__ == "__main__":
    batch = 2
    seq_len = 8
    input_size = 4
    n_hiddens = 32
    output_size = 2
    trim_tap = 1

    key = jax.random.PRNGKey(0)
    kx, kp = jax.random.split(key)
    x = jax.random.normal(kx, (batch, seq_len, input_size), jnp.float32)  # [B, T, I]
    params = init_params(kp, input_size, n_hiddens, output_size, trim_tap)

    out = decoder_forward(x, params, trim_tap)
    out = jax.block_until_ready(out)

    ref = reference_forward(x, params, trim_tap)
    assert out.shape == (batch, output_size)
    # Tolerance loosened vs. the pure-f32 reference: the kernel feeds the MXU
    # bf16 operands (f32 accumulation), so the recurrence drifts slightly.
    assert jnp.allclose(out, ref, atol=5e-2, rtol=5e-2), (out, ref)

    print("KERNEL_OK")
</pallas_src>

<mosaic_0001>
module attributes {stable_mosaic.version = 11 : i64} {
  func.func @decoder_rnn_kernel(%arg0: memref<16x4xf32, #tpu.memory_space<vmem>>, %arg1: memref<4x32xbf16, #tpu.memory_space<vmem>>, %arg2: memref<32x32xbf16, #tpu.memory_space<vmem>>, %arg3: memref<1x32xf32, #tpu.memory_space<vmem>>, %arg4: memref<96x128xbf16, #tpu.memory_space<vmem>>, %arg5: memref<1x128xf32, #tpu.memory_space<vmem>>, %arg6: memref<2x128xf32, #tpu.memory_space<vmem>>) attributes {dimension_semantics = [], scalar_prefetch = 0 : i64, scratch_operands = 0 : i64, tpu.core_type = #tpu.core_type<tc>} {
    %c0 = arith.constant 0 : index
    %c0_0 = arith.constant 0 : index
    %0 = vector.load %arg1[%c0, %c0_0] : memref<4x32xbf16, #tpu.memory_space<vmem>>, vector<4x32xbf16>
    %c0_1 = arith.constant 0 : index
    %c0_2 = arith.constant 0 : index
    %1 = vector.load %arg2[%c0_1, %c0_2] : memref<32x32xbf16, #tpu.memory_space<vmem>>, vector<32x32xbf16>
    %c0_3 = arith.constant 0 : index
    %c0_4 = arith.constant 0 : index
    %2 = vector.load %arg0[%c0_3, %c0_4] : memref<16x4xf32, #tpu.memory_space<vmem>>, vector<16x4xf32>
    %3 = arith.truncf %2 : vector<16x4xf32> to vector<16x4xbf16>
    %cst = arith.constant dense<0.000000e+00> : vector<16x32xf32>
    %4 = tpu.matmul %3, %0, %cst {dimension_numbers = #tpu.dot_dimension_numbers<[1], [0], [0], [1], [0, 0, 1, 1], [], []>} : vector<16x4xbf16>, vector<4x32xbf16>, vector<16x32xf32> -> vector<16x32xf32>
    %c0_5 = arith.constant 0 : index
    %c0_6 = arith.constant 0 : index
    %5 = vector.load %arg3[%c0_5, %c0_6] : memref<1x32xf32, #tpu.memory_space<vmem>>, vector<1x32xf32>
    %6 = vector.broadcast %5 : vector<1x32xf32> to vector<16x32xf32>
    %7 = arith.addf %4, %6 : vector<16x32xf32>
    %8 = vector.extract_strided_slice %7 {offsets = [0, 0], sizes = [1, 32], strides = [1, 1]} : vector<16x32xf32> to vector<1x32xf32>
    %9 = vector.extract_strided_slice %7 {offsets = [8, 0], sizes = [1, 32], strides = [1, 1]} : vector<16x32xf32> to vector<1x32xf32>
    %10 = tpu.concatenate %8, %9 in 0 : vector<1x32xf32>, vector<1x32xf32> -> vector<2x32xf32>
    %11 = math.tanh %10 : vector<2x32xf32>
    %12 = arith.truncf %11 : vector<2x32xf32> to vector<2x32xbf16>
    %cst_7 = arith.constant dense<0.000000e+00> : vector<2x32xf32>
    %13 = tpu.matmul %12, %1, %cst_7 {dimension_numbers = #tpu.dot_dimension_numbers<[1], [0], [0], [1], [0, 0, 1, 1], [], []>} : vector<2x32xbf16>, vector<32x32xbf16>, vector<2x32xf32> -> vector<2x32xf32>
    %14 = vector.extract_strided_slice %7 {offsets = [1, 0], sizes = [1, 32], strides = [1, 1]} : vector<16x32xf32> to vector<1x32xf32>
    %15 = vector.extract_strided_slice %7 {offsets = [9, 0], sizes = [1, 32], strides = [1, 1]} : vector<16x32xf32> to vector<1x32xf32>
    %16 = tpu.concatenate %14, %15 in 0 : vector<1x32xf32>, vector<1x32xf32> -> vector<2x32xf32>
    %17 = arith.addf %13, %16 : vector<2x32xf32>
    %18 = math.tanh %17 : vector<2x32xf32>
    %19 = arith.truncf %18 : vector<2x32xf32> to vector<2x32xbf16>
    %cst_8 = arith.constant dense<0.000000e+00> : vector<2x32xf32>
    %20 = tpu.matmul %19, %1, %cst_8 {dimension_numbers = #tpu.dot_dimension_numbers<[1], [0], [0], [1], [0, 0, 1, 1], [], []>} : vector<2x32xbf16>, vector<32x32xbf16>, vector<2x32xf32> -> vector<2x32xf32>
    %21 = vector.extract_strided_slice %7 {offsets = [2, 0], sizes = [1, 32], strides = [1, 1]} : vector<16x32xf32> to vector<1x32xf32>
    %22 = vector.extract_strided_slice %7 {offsets = [10, 0], sizes = [1, 32], strides = [1, 1]} : vector<16x32xf32> to vector<1x32xf32>
    %23 = tpu.concatenate %21, %22 in 0 : vector<1x32xf32>, vector<1x32xf32> -> vector<2x32xf32>
    %24 = arith.addf %20, %23 : vector<2x32xf32>
    %25 = math.tanh %24 : vector<2x32xf32>
    %26 = arith.truncf %25 : vector<2x32xf32> to vector<2x32xbf16>
    %cst_9 = arith.constant dense<0.000000e+00> : vector<2x32xf32>
    %27 = tpu.matmul %26, %1, %cst_9 {dimension_numbers = #tpu.dot_dimension_numbers<[1], [0], [0], [1], [0, 0, 1, 1], [], []>} : vector<2x32xbf16>, vector<32x32xbf16>, vector<2x32xf32> -> vector<2x32xf32>
    %28 = vector.extract_strided_slice %7 {offsets = [3, 0], sizes = [1, 32], strides = [1, 1]} : vector<16x32xf32> to vector<1x32xf32>
    %29 = vector.extract_strided_slice %7 {offsets = [11, 0], sizes = [1, 32], strides = [1, 1]} : vector<16x32xf32> to vector<1x32xf32>
    %30 = tpu.concatenate %28, %29 in 0 : vector<1x32xf32>, vector<1x32xf32> -> vector<2x32xf32>
    %31 = arith.addf %27, %30 : vector<2x32xf32>
    %32 = math.tanh %31 : vector<2x32xf32>
    %33 = arith.truncf %32 : vector<2x32xf32> to vector<2x32xbf16>
    %34 = arith.truncf %32 : vector<2x32xf32> to vector<2x32xbf16>
    %cst_10 = arith.constant dense<0.000000e+00> : vector<2x32xf32>
    %35 = tpu.matmul %34, %1, %cst_10 {dimension_numbers = #tpu.dot_dimension_numbers<[1], [0], [0], [1], [0, 0, 1, 1], [], []>} : vector<2x32xbf16>, vector<32x32xbf16>, vector<2x32xf32> -> vector<2x32xf32>
    %36 = vector.extract_strided_slice %7 {offsets = [4, 0], sizes = [1, 32], strides = [1, 1]} : vector<16x32xf32> to vector<1x32xf32>
    %37 = vector.extract_strided_slice %7 {offsets = [12, 0], sizes = [1, 32], strides = [1, 1]} : vector<16x32xf32> to vector<1x32xf32>
    %38 = tpu.concatenate %36, %37 in 0 : vector<1x32xf32>, vector<1x32xf32> -> vector<2x32xf32>
    %39 = arith.addf %35, %38 : vector<2x32xf32>
    %40 = math.tanh %39 : vector<2x32xf32>
    %41 = arith.truncf %40 : vector<2x32xf32> to vector<2x32xbf16>
    %42 = arith.truncf %40 : vector<2x32xf32> to vector<2x32xbf16>
    %cst_11 = arith.constant dense<0.000000e+00> : vector<2x32xf32>
    %43 = tpu.matmul %42, %1, %cst_11 {dimension_numbers = #tpu.dot_dimension_numbers<[1], [0], [0], [1], [0, 0, 1, 1], [], []>} : vector<2x32xbf16>, vector<32x32xbf16>, vector<2x32xf32> -> vector<2x32xf32>
    %44 = vector.extract_strided_slice %7 {offsets = [5, 0], sizes = [1, 32], strides = [1, 1]} : vector<16x32xf32> to vector<1x32xf32>
    %45 = vector.extract_strided_slice %7 {offsets = [13, 0], sizes = [1, 32], strides = [1, 1]} : vector<16x32xf32> to vector<1x32xf32>
    %46 = tpu.concatenate %44, %45 in 0 : vector<1x32xf32>, vector<1x32xf32> -> vector<2x32xf32>
    %47 = arith.addf %43, %46 : vector<2x32xf32>
    %48 = math.tanh %47 : vector<2x32xf32>
    %49 = arith.truncf %48 : vector<2x32xf32> to vector<2x32xbf16>
    %50 = tpu.concatenate %33, %41, %49 in 1 : vector<2x32xbf16>, vector<2x32xbf16>, vector<2x32xbf16> -> vector<2x96xbf16>
    %c0_12 = arith.constant 0 : index
    %c0_13 = arith.constant 0 : index
    %51 = vector.load %arg4[%c0_12, %c0_13] : memref<96x128xbf16, #tpu.memory_space<vmem>>, vector<96x128xbf16>
    %cst_14 = arith.constant dense<0.000000e+00> : vector<2x128xf32>
    %52 = tpu.matmul %50, %51, %cst_14 {dimension_numbers = #tpu.dot_dimension_numbers<[1], [0], [0], [1], [0, 0, 1, 1], [], []>} : vector<2x96xbf16>, vector<96x128xbf16>, vector<2x128xf32> -> vector<2x128xf32>
    %c0_15 = arith.constant 0 : index
    %c0_16 = arith.constant 0 : index
    %53 = vector.load %arg5[%c0_15, %c0_16] : memref<1x128xf32, #tpu.memory_space<vmem>>, vector<1x128xf32>
    %54 = vector.broadcast %53 : vector<1x128xf32> to vector<2x128xf32>
    %55 = arith.addf %52, %54 : vector<2x128xf32>
    %c0_17 = arith.constant 0 : index
    %c0_18 = arith.constant 0 : index
    %56 = vector.load %arg6[%c0_17, %c0_18] : memref<2x128xf32, #tpu.memory_space<vmem>>, vector<2x128xf32>
    tpu.vector_store %arg6[%c0_17, %c0_18], %55 {strides = array<i32>} : memref<2x128xf32, #tpu.memory_space<vmem>>, vector<2x128xf32>,
    return
  }
}

</mosaic_0001>

<llo_original>
// kernel: tpu_custom_call.1
$region0: #{tpu_custom_call.1}
  #allocation0 [shape = 'u32[]', space=smem, size = 0x4, offset = 0x4, fixed_abs, tag = 'smem constant byte address 0x4 - core index']
  #allocation1 [shape = 'u32[144,128]{1,0:T(1,128)}', space=vmem, size = 0x12000, scoped, tag = 'internal scratch']
  %s0 = inlined_call_operand.vmem [shape: f32[16,4], index: 0, kind: input, shape index: {}]
  %s1 = inlined_call_operand.vmem [shape: bf16[4,32], index: 1, kind: input, shape index: {}]
  %s2 = inlined_call_operand.vmem [shape: bf16[32,32], index: 2, kind: input, shape index: {}]
  %s3 = inlined_call_operand.vmem [shape: f32[1,32], index: 3, kind: input, shape index: {}]
  %s4 = inlined_call_operand.hbm [shape: bf16[96,128], index: 4, kind: input, shape index: {}]
  %s5 = inlined_call_operand.vmem [shape: f32[1,128], index: 5, kind: input, shape index: {}]
  %s6 = inlined_call_operand.hbm [shape: f32[2,128], index: 6, kind: output, shape index: {}]
  %s7 = sld [smem:[#allocation0]]
  $region38: #{tpu_custom_call.1} parent=0
    _
  %s9 = ssub.s32 1, %s7
  %s10 = scalar_select 0, %s9, %s7
  $region1: #{tpu_custom_call.1} parent=0
    #allocation2 [shape = 'u8[24576]{0}', space=vmem, size = 0x6000, scoped, tag = 'input window, operand 4, single buffered']
    #allocation3 [shape = 's32[1]{0}', space=sflag, size = 0x4, scoped, tag = 'scoped memory for tpu_custom_call.1']
    #allocation4 [shape = 's32[1]{0}', space=sflag, size = 0x4, scoped, tag = 'scoped memory for tpu_custom_call.1']
    #allocation5 [shape = 'u8[1024]{0}', space=vmem, size = 0x400, scoped, tag = 'output window, operand 0, single buffered']
    %11 = vsyncpa [#allocation3], 0
    %12 = vsyncpa [#allocation4], 0
    // Predicated region
    $region2: #{tpu_custom_call.1} parent=1 // pred_check
      _
    $region3: #{tpu_custom_call.1} parent=1 // pred_check_branch
      %14 = sbr.rel (0) target = $region5
    $region4: #{tpu_custom_call.1} parent=1 // pred_region
      _
    $region5: #{tpu_custom_call.1} parent=1 // pred_fallthru
      _
    // Predicated region
    $region6: #{tpu_custom_call.1} parent=1 // pred_check
      _
    $region7: #{tpu_custom_call.1} parent=1 // pred_check_branch
      %16 = sbr.rel (0) target = $region9
    $region8: #{tpu_custom_call.1} parent=1 // pred_region
      _
    $region9: #{tpu_custom_call.1} parent=1 // pred_fallthru
      _
    // Predicated region
    $region10: #{tpu_custom_call.1} parent=1 // pred_check
      _
    $region11: #{tpu_custom_call.1} parent=1 // pred_check_branch
      %18 = sbr.rel (0) target = $region13
    $region12: #{tpu_custom_call.1} parent=1 // pred_region
      _
    $region13: #{tpu_custom_call.1} parent=1 // pred_fallthru
      _
    // Predicated region
    $region14: #{tpu_custom_call.1} parent=1 // pred_check
      _
    $region15: #{tpu_custom_call.1} parent=1 // pred_check_branch
      %20 = sbr.rel (0) target = $region17
    $region16: #{tpu_custom_call.1} parent=1 // pred_region
      _
    $region17: #{tpu_custom_call.1} parent=1 // pred_fallthru
      _
    // Predicated region
    $region18: #{tpu_custom_call.1} parent=1 // pred_check
      _
    $region19: #{tpu_custom_call.1} parent=1 // pred_check_branch
      %22 = sbr.rel (0) target = $region21
    $region20: #{tpu_custom_call.1} parent=1 // pred_region
      %s24 = ssub.s32 768, 768
      %25 = vsyncadd [#allocation3], %s24
      %s26 = sshll.u32 [#allocation2], 4
      %s27 = int_to_ptr.vmem [resolvable:$true] %s26
      %32 = dma.hbm_to_vmem [thread:$0]  %s4, 768, %s27, [#allocation3], 64, 64, 4
    $region21: #{tpu_custom_call.1} parent=1 // pred_fallthru
      _
    // Predicated region
    $region22: #{tpu_custom_call.1} parent=1 // pred_check
      _
    $region23: #{tpu_custom_call.1} parent=1 // pred_check_branch
      %34 = sbr.rel (0) target = $region25
    $region24: #{tpu_custom_call.1} parent=1 // pred_region
      _
    $region25: #{tpu_custom_call.1} parent=1 // pred_fallthru
      _
    // Predicated region
    $region26: #{tpu_custom_call.1} parent=1 // pred_check
      _
    $region27: #{tpu_custom_call.1} parent=1 // pred_check_branch
      %36 = sbr.rel (0) target = $region29
    $region28: #{tpu_custom_call.1} parent=1 // pred_region
      %37 = dma.done [#allocation3], 768
    $region29: #{tpu_custom_call.1} parent=1 // pred_fallthru
      _
    %v39 = vld [vmem:[%s1] sm:$0x3]
    %v40 = vld [vmem:[%s2] sm:$0xf]
    %v41 = vld [vmem:[%s2 + $0x4] sm:$0xf]
    %v42 = vld [vmem:[%s2 + $0x8] sm:$0xf]
    %v43 = vld [vmem:[%s2 + $0xc] sm:$0xf]
    %v44 = vld [vmem:[%s0] sm:$0xff]
    %v45 = vld [vmem:[%s0 + $0x8] sm:$0xff]
    %v46 = vpack.c.bf16 %v45, %v44
    %v47 = vld [vmem:[%s3] sm:$0x1]
    %v49 = vlaneseq
    %v50 = vshrl.u32 %v49, 7
    %v51 = vsub.s32 0, %v50
    %v52 = vrot.slane %v47, %v51
    %vm54 = vcmask 31744
    %v56 = vsel %vm54, %v46, 0
    %vm58 = vcmask 1041408
    %v60 = vsel %vm58, %v39, 0
    %62 = vmatprep.subr.bf16.mxu0 0
    %63 = vmatpush1.bf16.msra.mxu0 %v60
    %64 = vmatprep.subr.bf16.mxu0 0
    %65 = vmatpush1.bf16.msra.mxu0 0
    %66 = vmatprep.subr.bf16.mxu0 0
    %67 = vmatpush1.bf16.msra.mxu0 0
    %68 = vmatprep.subr.bf16.mxu0 0
    %69 = vmatpush1.bf16.msra.mxu0 0
    %70 = vmatprep.subr.bf16.mxu0 0
    %71 = vmatpush1.bf16.msra.mxu0 0
    %72 = vmatprep.subr.bf16.mxu0 0
    %73 = vmatpush1.bf16.msra.mxu0 0
    %74 = vmatprep.subr.bf16.mxu0 0
    %75 = vmatpush1.bf16.msra.mxu0 0
    %76 = vmatprep.subr.bf16.mxu0 0
    %77 = vmatpush1.bf16.msra.mxu0 0
    %78 = vmatprep.subr.bf16.mxu0 0
    %79 = vmatpush1.bf16.msra.mxu0 0
    %80 = vmatprep.subr.bf16.mxu0 0
    %81 = vmatpush1.bf16.msra.mxu0 0
    %82 = vmatprep.subr.bf16.mxu0 0
    %83 = vmatpush1.bf16.msra.mxu0 0
    %84 = vmatprep.subr.bf16.mxu0 0
    %85 = vmatpush1.bf16.msra.mxu0 0
    %86 = vmatprep.subr.bf16.mxu0 0
    %87 = vmatpush1.bf16.msra.mxu0 0
    %88 = vmatprep.subr.bf16.mxu0 0
    %89 = vmatpush1.bf16.msra.mxu0 0
    %90 = vmatprep.subr.bf16.mxu0 0
    %91 = vmatpush1.bf16.msra.mxu0 0
    %92 = vmatprep.subr.bf16.mxu0 0
    %93 = vmatpush1.bf16.msra.mxu0 0
    %94 = vmatprep.mubr.bf16.mxu0 0
    %95 = vmatmul.mubr.bf16.gmra.mrb[0].mxu0 %v56
    %v96 = vpop.f32.mrb[0].mxu0
    %v97 = vadd.f32 %v52, %v96
    %v98 = vpop.f32.mrb[0].mxu0
    %v99 = vpop.f32.mrb[0].mxu0
    %v100 = vadd.f32 %v52, %v99
    %v101 = vpop.f32.mrb[0].mxu0
    %102 = vdwg.mxu0
    %v104 = vrot.slane %v100, 7
    %vm106 = vcmask 1040384
    %v107 = vsel %vm106, %v97, %v104
    %v108 = vtanh.pop %v107
    %v109 = vpack.c.bf16 %v108, %v108
    %v111 = vrot.slane %v97, 1
    %v113 = vsel %vm106, %v111, %v100
    %v118 = vunpack.c.l.b16 %v40
    %v119 = vunpack.c.l.b16 %v41
    %v120 = vunpack.c.l.b16 %v42
    %v121 = vunpack.c.l.b16 %v43
    %v122 = vpack.c.b16 %v119, %v118
    %v123 = vpack.c.b16 %v121, %v120
    %vm126 = vcmask 261120
    %v128 = vsel %vm126, %v109, 0
    %130 = vmatprep.subr.bf16.mxu0 0
    %131 = vmatpush1.bf16.msra.mxu0 %v122
    %132 = vmatprep.subr.bf16.mxu0 0
    %133 = vmatpush1.bf16.msra.mxu0 %v123
    %134 = vmatprep.subr.bf16.mxu0 0
    %135 = vmatpush1.bf16.msra.mxu0 0
    %136 = vmatprep.subr.bf16.mxu0 0
    %137 = vmatpush1.bf16.msra.mxu0 0
    %138 = vmatprep.subr.bf16.mxu0 0
    %139 = vmatpush1.bf16.msra.mxu0 0
    %140 = vmatprep.subr.bf16.mxu0 0
    %141 = vmatpush1.bf16.msra.mxu0 0
    %142 = vmatprep.subr.bf16.mxu0 0
    %143 = vmatpush1.bf16.msra.mxu0 0
    %144 = vmatprep.subr.bf16.mxu0 0
    %145 = vmatpush1.bf16.msra.mxu0 0
    %146 = vmatprep.subr.bf16.mxu0 0
    %147 = vmatpush1.bf16.msra.mxu0 0
    %148 = vmatprep.subr.bf16.mxu0 0
    %149 = vmatpush1.bf16.msra.mxu0 0
    %150 = vmatprep.subr.bf16.mxu0 0
    %151 = vmatpush1.bf16.msra.mxu0 0
    %152 = vmatprep.subr.bf16.mxu0 0
    %153 = vmatpush1.bf16.msra.mxu0 0
    %154 = vmatprep.subr.bf16.mxu0 0
    %155 = vmatpush1.bf16.msra.mxu0 0
    %156 = vmatprep.subr.bf16.mxu0 0
    %157 = vmatpush1.bf16.msra.mxu0 0
    %158 = vmatprep.subr.bf16.mxu0 0
    %159 = vmatpush1.bf16.msra.mxu0 0
    %160 = vmatprep.subr.bf16.mxu0 0
    %161 = vmatpush1.bf16.msra.mxu0 0
    %162 = vmatprep.mubr.bf16.mxu0 0
    %163 = vmatmul.mubr.bf16.gmra.mrb[0].mxu0 %v128
    %v164 = vpop.f32.mrb[0].mxu0
    %v165 = vadd.f32 %v113, %v164
    %v166 = vpop.f32.mrb[0].mxu0
    %v167 = vpop.f32.mrb[0].mxu0
    %v168 = vpop.f32.mrb[0].mxu0
    %169 = vdwg.mxu0
    %v170 = vtanh.pop %v165
    %v171 = vpack.c.bf16 %v170, %v170
    %v172 = vrot.slane %v97, 2
    %v174 = vrot.slane %v100, 1
    %v176 = vsel %vm106, %v172, %v174
    %v178 = vsel %vm126, %v171, 0
    %180 = vmatprep.subr.bf16.mxu0 0
    %181 = vmatpush1.bf16.msra.mxu0 %v122
    %182 = vmatprep.subr.bf16.mxu0 0
    %183 = vmatpush1.bf16.msra.mxu0 %v123
    %184 = vmatprep.subr.bf16.mxu0 0
    %185 = vmatpush1.bf16.msra.mxu0 0
    %186 = vmatprep.subr.bf16.mxu0 0
    %187 = vmatpush1.bf16.msra.mxu0 0
    %188 = vmatprep.subr.bf16.mxu0 0
    %189 = vmatpush1.bf16.msra.mxu0 0
    %190 = vmatprep.subr.bf16.mxu0 0
    %191 = vmatpush1.bf16.msra.mxu0 0
    %192 = vmatprep.subr.bf16.mxu0 0
    %193 = vmatpush1.bf16.msra.mxu0 0
    %194 = vmatprep.subr.bf16.mxu0 0
    %195 = vmatpush1.bf16.msra.mxu0 0
    %196 = vmatprep.subr.bf16.mxu0 0
    %197 = vmatpush1.bf16.msra.mxu0 0
    %198 = vmatprep.subr.bf16.mxu0 0
    %199 = vmatpush1.bf16.msra.mxu0 0
    %200 = vmatprep.subr.bf16.mxu0 0
    %201 = vmatpush1.bf16.msra.mxu0 0
    %202 = vmatprep.subr.bf16.mxu0 0
    %203 = vmatpush1.bf16.msra.mxu0 0
    %204 = vmatprep.subr.bf16.mxu0 0
    %205 = vmatpush1.bf16.msra.mxu0 0
    %206 = vmatprep.subr.bf16.mxu0 0
    %207 = vmatpush1.bf16.msra.mxu0 0
    %208 = vmatprep.subr.bf16.mxu0 0
    %209 = vmatpush1.bf16.msra.mxu0 0
    %210 = vmatprep.subr.bf16.mxu0 0
    %211 = vmatpush1.bf16.msra.mxu0 0
    %212 = vmatprep.mubr.bf16.mxu0 0
    %213 = vmatmul.mubr.bf16.gmra.mrb[0].mxu0 %v178
    %v214 = vpop.f32.mrb[0].mxu0
    %v215 = vadd.f32 %v176, %v214
    %v216 = vpop.f32.mrb[0].mxu0
    %v217 = vpop.f32.mrb[0].mxu0
    %v218 = vpop.f32.mrb[0].mxu0
    %219 = vdwg.mxu0
    %v220 = vtanh.pop %v215
    %v221 = vpack.c.bf16 %v220, %v220
    %v222 = vrot.slane %v97, 3
    %v224 = vrot.slane %v100, 2
    %v226 = vsel %vm106, %v222, %v224
    %v228 = vsel %vm126, %v221, 0
    %230 = vmatprep.subr.bf16.mxu0 0
    %231 = vmatpush1.bf16.msra.mxu0 %v122
    %232 = vmatprep.subr.bf16.mxu0 0
    %233 = vmatpush1.bf16.msra.mxu0 %v123
    %234 = vmatprep.subr.bf16.mxu0 0
    %235 = vmatpush1.bf16.msra.mxu0 0
    %236 = vmatprep.subr.bf16.mxu0 0
    %237 = vmatpush1.bf16.msra.mxu0 0
    %238 = vmatprep.subr.bf16.mxu0 0
    %239 = vmatpush1.bf16.msra.mxu0 0
    %240 = vmatprep.subr.bf16.mxu0 0
    %241 = vmatpush1.bf16.msra.mxu0 0
    %242 = vmatprep.subr.bf16.mxu0 0
    %243 = vmatpush1.bf16.msra.mxu0 0
    %244 = vmatprep.subr.bf16.mxu0 0
    %245 = vmatpush1.bf16.msra.mxu0 0
    %246 = vmatprep.subr.bf16.mxu0 0
    %247 = vmatpush1.bf16.msra.mxu0 0
    %248 = vmatprep.subr.bf16.mxu0 0
    %249 = vmatpush1.bf16.msra.mxu0 0
    %250 = vmatprep.subr.bf16.mxu0 0
    %251 = vmatpush1.bf16.msra.mxu0 0
    %252 = vmatprep.subr.bf16.mxu0 0
    %253 = vmatpush1.bf16.msra.mxu0 0
    %254 = vmatprep.subr.bf16.mxu0 0
    %255 = vmatpush1.bf16.msra.mxu0 0
    %256 = vmatprep.subr.bf16.mxu0 0
    %257 = vmatpush1.bf16.msra.mxu0 0
    %258 = vmatprep.subr.bf16.mxu0 0
    %259 = vmatpush1.bf16.msra.mxu0 0
    %260 = vmatprep.subr.bf16.mxu0 0
    %261 = vmatpush1.bf16.msra.mxu0 0
    %262 = vmatprep.mubr.bf16.mxu0 0
    %263 = vmatmul.mubr.bf16.gmra.mrb[0].mxu0 %v228
    %v264 = vpop.f32.mrb[0].mxu0
    %v265 = vadd.f32 %v226, %v264
    %v266 = vpop.f32.mrb[0].mxu0
    %v267 = vpop.f32.mrb[0].mxu0
    %v268 = vpop.f32.mrb[0].mxu0
    %269 = vdwg.mxu0
    %v270 = vtanh.pop %v265
    %v271 = vpack.c.bf16 %v270, %v270
    %v272 = vrot.slane %v97, 4
    %v274 = vrot.slane %v100, 3
    %v276 = vsel %vm106, %v272, %v274
    %v278 = vsel %vm126, %v271, 0
    %280 = vmatprep.subr.bf16.mxu0 0
    %281 = vmatpush1.bf16.msra.mxu0 %v122
    %282 = vmatprep.subr.bf16.mxu0 0
    %283 = vmatpush1.bf16.msra.mxu0 %v123
    %284 = vmatprep.subr.bf16.mxu0 0
    %285 = vmatpush1.bf16.msra.mxu0 0
    %286 = vmatprep.subr.bf16.mxu0 0
    %287 = vmatpush1.bf16.msra.mxu0 0
    %288 = vmatprep.subr.bf16.mxu0 0
    %289 = vmatpush1.bf16.msra.mxu0 0
    %290 = vmatprep.subr.bf16.mxu0 0
    %291 = vmatpush1.bf16.msra.mxu0 0
    %292 = vmatprep.subr.bf16.mxu0 0
    %293 = vmatpush1.bf16.msra.mxu0 0
    %294 = vmatprep.subr.bf16.mxu0 0
    %295 = vmatpush1.bf16.msra.mxu0 0
    %296 = vmatprep.subr.bf16.mxu0 0
    %297 = vmatpush1.bf16.msra.mxu0 0
    %298 = vmatprep.subr.bf16.mxu0 0
    %299 = vmatpush1.bf16.msra.mxu0 0
    %300 = vmatprep.subr.bf16.mxu0 0
    %301 = vmatpush1.bf16.msra.mxu0 0
    %302 = vmatprep.subr.bf16.mxu0 0
    %303 = vmatpush1.bf16.msra.mxu0 0
    %304 = vmatprep.subr.bf16.mxu0 0
    %305 = vmatpush1.bf16.msra.mxu0 0
    %306 = vmatprep.subr.bf16.mxu0 0
    %307 = vmatpush1.bf16.msra.mxu0 0
    %308 = vmatprep.subr.bf16.mxu0 0
    %309 = vmatpush1.bf16.msra.mxu0 0
    %310 = vmatprep.subr.bf16.mxu0 0
    %311 = vmatpush1.bf16.msra.mxu0 0
    %312 = vmatprep.mubr.bf16.mxu0 0
    %313 = vmatmul.mubr.bf16.gmra.mrb[0].mxu0 %v278
    %v314 = vpop.f32.mrb[0].mxu0
    %v315 = vadd.f32 %v276, %v314
    %v316 = vpop.f32.mrb[0].mxu0
    %v317 = vpop.f32.mrb[0].mxu0
    %v318 = vpop.f32.mrb[0].mxu0
    %319 = vdwg.mxu0
    %v320 = vtanh.pop %v315
    %v321 = vpack.c.bf16 %v320, %v320
    %v322 = vrot.slane %v97, 5
    %v324 = vrot.slane %v100, 4
    %v326 = vsel %vm106, %v322, %v324
    %v328 = vsel %vm126, %v321, 0
    %330 = vmatprep.subr.bf16.mxu0 0
    %331 = vmatpush1.bf16.msra.mxu0 %v122
    %332 = vmatprep.subr.bf16.mxu0 0
    %333 = vmatpush1.bf16.msra.mxu0 %v123
    %334 = vmatprep.subr.bf16.mxu0 0
    %335 = vmatpush1.bf16.msra.mxu0 0
    %336 = vmatprep.subr.bf16.mxu0 0
    %337 = vmatpush1.bf16.msra.mxu0 0
    %338 = vmatprep.subr.bf16.mxu0 0
    %339 = vmatpush1.bf16.msra.mxu0 0
    %340 = vmatprep.subr.bf16.mxu0 0
    %341 = vmatpush1.bf16.msra.mxu0 0
    %342 = vmatprep.subr.bf16.mxu0 0
    %343 = vmatpush1.bf16.msra.mxu0 0
    %344 = vmatprep.subr.bf16.mxu0 0
    %345 = vmatpush1.bf16.msra.mxu0 0
    %346 = vmatprep.subr.bf16.mxu0 0
    %347 = vmatpush1.bf16.msra.mxu0 0
    %348 = vmatprep.subr.bf16.mxu0 0
    %349 = vmatpush1.bf16.msra.mxu0 0
    %350 = vmatprep.subr.bf16.mxu0 0
    %351 = vmatpush1.bf16.msra.mxu0 0
    %352 = vmatprep.subr.bf16.mxu0 0
    %353 = vmatpush1.bf16.msra.mxu0 0
    %354 = vmatprep.subr.bf16.mxu0 0
    %355 = vmatpush1.bf16.msra.mxu0 0
    %356 = vmatprep.subr.bf16.mxu0 0
    %357 = vmatpush1.bf16.msra.mxu0 0
    %358 = vmatprep.subr.bf16.mxu0 0
    %359 = vmatpush1.bf16.msra.mxu0 0
    %360 = vmatprep.subr.bf16.mxu0 0
    %361 = vmatpush1.bf16.msra.mxu0 0
    %362 = vmatprep.mubr.bf16.mxu0 0
    %363 = vmatmul.mubr.bf16.gmra.mrb[0].mxu0 %v328
    %v364 = vpop.f32.mrb[0].mxu0
    %v365 = vadd.f32 %v326, %v364
    %v366 = vpop.f32.mrb[0].mxu0
    %v367 = vpop.f32.mrb[0].mxu0
    %v368 = vpop.f32.mrb[0].mxu0
    %369 = vdwg.mxu0
    %v370 = vtanh.pop %v365
    %v371 = vpack.c.bf16 %v370, %v370
    %373 = vrot.lane.b32.xlu0 %v321, 32
    %v374 = vpop.permute.xlu0 %373
    %376 = vrot.lane.b32.xlu0 %v371, 64
    %v377 = vpop.permute.xlu0 %376
    %v379 = vsel %vm126, %v271, %v374
    %vm380 = vcmask 523264
    %v382 = vsel %vm380, %v379, %v377
    %v383 = vld [vmem:[#allocation2] sm:$0xf]
    %v384 = vld [vmem:[#allocation2 + $0x4] sm:$0xf]
    %v385 = vld [vmem:[#allocation2 + $0x8] sm:$0xf]
    %v386 = vld [vmem:[#allocation2 + $0xc] sm:$0xf]
    %v387 = vld [vmem:[#allocation2 + $0x10] sm:$0xf]
    %v388 = vld [vmem:[#allocation2 + $0x14] sm:$0xf]
    %v389 = vld [vmem:[#allocation2 + $0x18] sm:$0xf]
    %v390 = vld [vmem:[#allocation2 + $0x1c] sm:$0xf]
    %v391 = vld [vmem:[#allocation2 + $0x20] sm:$0xf]
    %v392 = vld [vmem:[#allocation2 + $0x24] sm:$0xf]
    %v393 = vld [vmem:[#allocation2 + $0x28] sm:$0xf]
    %v394 = vld [vmem:[#allocation2 + $0x2c] sm:$0xf]
    %v395 = vld [vmem:[%s5] sm:$0x1]
    %v397 = vlaneseq
    %v398 = vshrl.u32 %v397, 7
    %v399 = vsub.s32 0, %v398
    %v400 = vrot.slane %v395, %v399
    %v414 = vunpack.c.l.b16 %v383
    %v415 = vunpack.c.l.b16 %v384
    %v416 = vunpack.c.l.b16 %v385
    %v417 = vunpack.c.l.b16 %v386
    %v418 = vunpack.c.l.b16 %v387
    %v419 = vunpack.c.l.b16 %v388
    %v420 = vunpack.c.l.b16 %v389
    %v421 = vunpack.c.l.b16 %v390
    %v422 = vunpack.c.l.b16 %v391
    %v423 = vunpack.c.l.b16 %v392
    %v424 = vunpack.c.l.b16 %v393
    %v425 = vunpack.c.l.b16 %v394
    %v426 = vpack.c.b16 %v415, %v414
    %v427 = vpack.c.b16 %v417, %v416
    %v428 = vpack.c.b16 %v419, %v418
    %v429 = vpack.c.b16 %v421, %v420
    %v430 = vpack.c.b16 %v423, %v422
    %v431 = vpack.c.b16 %v425, %v424
    %vm438 = vcmask 785408
    %v439 = vsel %vm438, %v382, 0
    %441 = vmatprep.subr.bf16.mxu0 0
    %442 = vmatpush1.bf16.msra.mxu0 %v426
    %443 = vmatprep.subr.bf16.mxu0 0
    %444 = vmatpush1.bf16.msra.mxu0 %v427
    %445 = vmatprep.subr.bf16.mxu0 0
    %446 = vmatpush1.bf16.msra.mxu0 %v428
    %447 = vmatprep.subr.bf16.mxu0 0
    %448 = vmatpush1.bf16.msra.mxu0 %v429
    %449 = vmatprep.subr.bf16.mxu0 0
    %450 = vmatpush1.bf16.msra.mxu0 %v430
    %451 = vmatprep.subr.bf16.mxu0 0
    %452 = vmatpush1.bf16.msra.mxu0 %v431
    %453 = vmatprep.subr.bf16.mxu0 0
    %454 = vmatpush1.bf16.msra.mxu0 0
    %455 = vmatprep.subr.bf16.mxu0 0
    %456 = vmatpush1.bf16.msra.mxu0 0
    %457 = vmatprep.subr.bf16.mxu0 0
    %458 = vmatpush1.bf16.msra.mxu0 0
    %459 = vmatprep.subr.bf16.mxu0 0
    %460 = vmatpush1.bf16.msra.mxu0 0
    %461 = vmatprep.subr.bf16.mxu0 0
    %462 = vmatpush1.bf16.msra.mxu0 0
    %463 = vmatprep.subr.bf16.mxu0 0
    %464 = vmatpush1.bf16.msra.mxu0 0
    %465 = vmatprep.subr.bf16.mxu0 0
    %466 = vmatpush1.bf16.msra.mxu0 0
    %467 = vmatprep.subr.bf16.mxu0 0
    %468 = vmatpush1.bf16.msra.mxu0 0
    %469 = vmatprep.subr.bf16.mxu0 0
    %470 = vmatpush1.bf16.msra.mxu0 0
    %471 = vmatprep.subr.bf16.mxu0 0
    %472 = vmatpush1.bf16.msra.mxu0 0
    %473 = vmatprep.mubr.bf16.mxu0 0
    %474 = vmatmul.mubr.bf16.gmra.mrb[0].mxu0 %v439
    %v475 = vpop.f32.mrb[0].mxu0
    %v476 = vadd.f32 %v400, %v475
    %v477 = vpop.f32.mrb[0].mxu0
    %v478 = vpop.f32.mrb[0].mxu0
    %v479 = vpop.f32.mrb[0].mxu0
    %480 = vdwg.mxu0
    %481 = vst [vmem:[#allocation5] sm:$0x3] %v476
    // Predicated region
    $region30: #{tpu_custom_call.1} parent=1 // pred_check
      _
    $region31: #{tpu_custom_call.1} parent=1 // pred_check_branch
      %483 = sbr.rel (0) target = $region33
    $region32: #{tpu_custom_call.1} parent=1 // pred_region
      %s485 = ssub.s32 32, 32
      %486 = vsyncadd [#allocation4], %s485
      %s488 = sshll.u32 [#allocation5], 4
      %s489 = int_to_ptr.vmem [resolvable:$true] %s488
      %491 = dma.vmem_to_hbm [thread:$0]  %s489, 32, %s6, [#allocation4]
    $region33: #{tpu_custom_call.1} parent=1 // pred_fallthru
      _
    // Predicated region
    $region34: #{tpu_custom_call.1} parent=1 // pred_check
      _
    $region35: #{tpu_custom_call.1} parent=1 // pred_check_branch
      %493 = sbr.rel (0) target = $region37
    $region36: #{tpu_custom_call.1} parent=1 // pred_region
      %494 = dma.done [#allocation4], 32
    $region37: #{tpu_custom_call.1} parent=1 // pred_fallthru
      _
    %495 = vsyncpa [#allocation3], 1
    %496 = vsyncpa [#allocation4], 1

</llo_original>
